<compile_context>
chip_gen: v7x
topology: tpu7x:2x2x1
jax: 0.10.0
libtpu: 0.0.40
codegen_flags: <defaults>
</compile_context>

<pallas_src>
import jax
import jax.numpy as jnp
from jax.experimental import pallas as pl
from jax.experimental.pallas import tpu as pltpu


# ---------------------------------------------------------------------------
# Pallas kernels (all operands: channels in sublanes, rows in lanes)
# ---------------------------------------------------------------------------
def conv_pool_bn_relu_kernel(p_ref, w_ref, s_ref, b_ref, o_ref):
    """Fused: 3x3 conv (taps folded into K) -> 2x2 max-pool -> BN -> ReLU.

    p_ref : (4, 9*Cin, TM) bf16   im2col patches, four 2x2 pool taps on axis 0
    w_ref : (Cout, 9*Cin)  bf16   packed conv weights
    s_ref : (Cout, 1)      f32    folded BN scale
    b_ref : (Cout, 1)      f32    folded BN bias
    o_ref : (Cout, TM)     f32
    """
    w = w_ref[...]
    acc = jnp.dot(w, p_ref[0], preferred_element_type=jnp.float32)
    for t in range(1, 4):  # static unroll: pool-max over the four conv taps
        acc = jnp.maximum(
            acc, jnp.dot(w, p_ref[t], preferred_element_type=jnp.float32))
    y = acc * s_ref[...] + b_ref[...]
    o_ref[...] = jnp.maximum(y, 0.0)


def conv_bn_relu_kernel(p_ref, w_ref, s_ref, b_ref, o_ref):
    """Fused: 3x3 conv (single K = 9*Cin matmul) -> BN -> ReLU."""
    acc = jnp.dot(w_ref[...], p_ref[...], preferred_element_type=jnp.float32)
    o_ref[...] = jnp.maximum(acc * s_ref[...] + b_ref[...], 0.0)


def conv_bn_relu_residual_kernel(p_ref, w_ref, s_ref, b_ref, skip_ref, o_ref):
    """Last residue conv fused with the block combine:
       out = 2*skip + relu(bn(conv(.)))   (x = x + (residue(x) + shortcut(x)))."""
    acc = jnp.dot(w_ref[...], p_ref[...], preferred_element_type=jnp.float32)
    r = jnp.maximum(acc * s_ref[...] + b_ref[...], 0.0)
    o_ref[...] = 2.0 * skip_ref[...] + r


# ---------------------------------------------------------------------------
# Tiled pallas_call wrapper (row-tiled grid, double-buffered by BlockSpec)
# ---------------------------------------------------------------------------
def _round_up(x, m):
    return (x + m - 1) // m * m


def _choose_tile(m):
    # Lane-dense row tiles; 512-2048 rows give good DMA/compute overlap while a
    # double-buffered working set stays far below VMEM (v7x: 64 MiB physical).
    for t in (2048, 1024, 512, 256):
        if m >= t:
            return t
    return 128


def _pad_rows(a, m_pad):
    pad = m_pad - a.shape[-1]
    if pad == 0:
        return a
    return jnp.pad(a, [(0, 0)] * (a.ndim - 1) + [(0, pad)])


def _run_tiled(kernel, patch, weight, scale, bias, skip=None):
    """Run one fused conv kernel, tiled over the row (= lane) dimension."""
    cout, k = weight.shape
    m = patch.shape[-1]
    tm = _choose_tile(m)
    m_pad = _round_up(m, tm)
    grid = (m_pad // tm,)

    patch = _pad_rows(patch, m_pad)
    args = [patch, weight, scale, bias]

    def tiled_spec(shape):
        nd = len(shape)
        return pl.BlockSpec(shape[:-1] + (tm,),
                            lambda i, nd=nd: (0,) * (nd - 1) + (i,))

    def full_spec(shape):
        nd = len(shape)
        return pl.BlockSpec(shape, lambda i, nd=nd: (0,) * nd)

    in_specs = [tiled_spec(patch.shape), full_spec(weight.shape),
                full_spec(scale.shape), full_spec(bias.shape)]
    if skip is not None:
        skip = _pad_rows(skip, m_pad)
        args.append(skip)
        in_specs.append(tiled_spec(skip.shape))

    taps = patch.shape[0] if patch.ndim == 3 else 1
    flops = 2 * taps * m_pad * k * cout
    bytes_accessed = (int(patch.size) * patch.dtype.itemsize
                      + int(weight.size) * weight.dtype.itemsize
                      + (2 if skip is not None else 1) * m_pad * cout * 4)

    out = pl.pallas_call(
        kernel,
        out_shape=jax.ShapeDtypeStruct((cout, m_pad), jnp.float32),
        grid=grid,
        in_specs=in_specs,
        out_specs=pl.BlockSpec((cout, tm), lambda i: (0, i)),
        compiler_params=pltpu.CompilerParams(
            dimension_semantics=("parallel",),
            vmem_limit_bytes=32 * 1024 * 1024),
        cost_estimate=pl.CostEstimate(flops=flops, transcendentals=0,
                                      bytes_accessed=bytes_accessed),
    )(*args)
    return out[:, :m]


# ---------------------------------------------------------------------------
# Glue: im2col (K-major), pool-tap regrouping, weight packing, BN folding
# ---------------------------------------------------------------------------
def _im2col_3x3_T(x, stride=1):
    """x: (N,H,W,Cin) -> patches (9*Cin, N*Ho*Wo) for a pad=1 3x3 conv."""
    # TODO(synk): form the 9 taps in-kernel from a halo'd row slab (manual DMA)
    # to avoid materializing the 9x im2col copy in HBM.
    N, H, W, Cin = x.shape
    Ho = (H + 2 - 3) // stride + 1
    Wo = (W + 2 - 3) // stride + 1
    xp = jnp.pad(x, ((0, 0), (1, 1), (1, 1), (0, 0)))
    taps = []
    for kh in range(3):
        for kw in range(3):
            taps.append(xp[:, kh:kh + stride * (Ho - 1) + 1:stride,
                           kw:kw + stride * (Wo - 1) + 1:stride, :])
    p = jnp.stack(taps, axis=0)                     # (9, N, Ho, Wo, Cin)
    p = jnp.transpose(p, (0, 4, 1, 2, 3))           # (9, Cin, N, Ho, Wo)
    return p.reshape(9 * Cin, N * Ho * Wo), (N, Ho, Wo)


def _pool_group_T(p, N, Ho, Wo):
    """(K, N*Ho*Wo) -> (4, K, N*Hp*Wp): the four 2x2 pool taps on axis 0."""
    K = p.shape[0]
    Hp, Wp = Ho // 2, Wo // 2
    q = p.reshape(K, N, Ho, Wo)[:, :, :2 * Hp, :2 * Wp]
    q = q.reshape(K, N, Hp, 2, Wp, 2)
    q = jnp.transpose(q, (3, 5, 0, 1, 2, 4))        # (2, 2, K, N, Hp, Wp)
    return q.reshape(4, K, N * Hp * Wp), (N, Hp, Wp)


def _pack_weight(w_hwio):
    """(3,3,Cin,Cout) HWIO -> (Cout, 9*Cin) bf16 matching the patch K order."""
    cout = w_hwio.shape[-1]
    return jnp.transpose(w_hwio, (3, 0, 1, 2)).reshape(cout, -1).astype(jnp.bfloat16)


def _fold_bn(gamma, beta, mean, var, eps=1e-5):
    scale = gamma / jnp.sqrt(var + eps)
    bias = beta - mean * scale
    return scale.reshape(-1, 1), bias.reshape(-1, 1)


# ---------------------------------------------------------------------------
# BasicBlock forward
# ---------------------------------------------------------------------------
def basic_block_forward(x_nchw, params, num_blocks, stride=1):
    if num_blocks != 0 and stride != 1:
        # PyTorch's `R1 += shortcut(x)` only shape-checks for stride == 1.
        raise ValueError("residual path requires stride == 1")

    x = jnp.transpose(x_nchw, (0, 2, 3, 1)).astype(jnp.float32)  # NCHW -> NHWC
    planes = params["w1"].shape[-1]

    # convAndMaxpool: Conv3x3(stride, no bias) -> MaxPool(2,2) -> BN -> ReLU
    p1, (N, Ho, Wo) = _im2col_3x3_T(x, stride)
    p1g, (N, Hp, Wp) = _pool_group_T(p1, N, Ho, Wo)
    s1, b1 = _fold_bn(params["bn1_gamma"], params["bn1_beta"],
                      params["bn1_mean"], params["bn1_var"])
    y = _run_tiled(conv_pool_bn_relu_kernel, p1g.astype(jnp.bfloat16),
                   _pack_weight(params["w1"]), s1, b1)           # (planes, N*Hp*Wp)

    if num_blocks != 0:
        # residue: Conv3x3(stride) -> BN -> ReLU -> Conv3x3(1) -> BN -> ReLU
        # R1 = residue(x); R1 += shortcut(x); x = x + R1  ==>  out = 2*x + residue(x)
        y_img = jnp.transpose(y.reshape(planes, N, Hp, Wp), (1, 2, 3, 0))
        p2, (N2, H2, W2) = _im2col_3x3_T(y_img, stride)
        s2, b2 = _fold_bn(params["bn2_gamma"], params["bn2_beta"],
                          params["bn2_mean"], params["bn2_var"])
        r = _run_tiled(conv_bn_relu_kernel, p2.astype(jnp.bfloat16),
                       _pack_weight(params["w2"]), s2, b2)

        r_img = jnp.transpose(r.reshape(planes, N2, H2, W2), (1, 2, 3, 0))
        p3, (N3, H3, W3) = _im2col_3x3_T(r_img, 1)
        s3, b3 = _fold_bn(params["bn3_gamma"], params["bn3_beta"],
                          params["bn3_mean"], params["bn3_var"])
        y = _run_tiled(conv_bn_relu_residual_kernel, p3.astype(jnp.bfloat16),
                       _pack_weight(params["w3"]), s3, b3, skip=y)
        N, Hp, Wp = N3, H3, W3

    # (planes, N*Hp*Wp) -> NCHW
    return jnp.transpose(y.reshape(planes, N, Hp, Wp), (1, 0, 2, 3))


# ---------------------------------------------------------------------------
# Deterministic parameter init (synthetic; shapes follow the module __init__)
# ---------------------------------------------------------------------------
def init_params(key, in_planes, planes):
    ks = jax.random.split(key, 12)

    def conv_w(k, cin, cout):
        return 0.1 * jax.random.normal(k, (3, 3, cin, cout), jnp.float32)  # HWIO

    def bn_params(k1, k2, k3, c):
        gamma = 1.0 + 0.1 * jax.random.normal(k1, (c,), jnp.float32)
        beta = 0.1 * jax.random.normal(k2, (c,), jnp.float32)
        mean = 0.1 * jax.random.normal(k3, (c,), jnp.float32)
        var = 0.9 * jnp.ones((c,), jnp.float32)
        return gamma, beta, mean, var

    p = {"w1": conv_w(ks[0], in_planes, planes),
         "w2": conv_w(ks[1], planes, planes),
         "w3": conv_w(ks[2], planes, planes)}
    for i, name in enumerate(("bn1", "bn2", "bn3")):
        g, b, m, v = bn_params(ks[3 + 3 * i], ks[4 + 3 * i], ks[5 + 3 * i],
                               planes)
        p[f"{name}_gamma"], p[f"{name}_beta"] = g, b
        p[f"{name}_mean"], p[f"{name}_var"] = m, v
    return p


# ---------------------------------------------------------------------------
# Pure-JAX reference (conv operands in bf16 with f32 accumulation, matching
# the kernel's MXU precision; everything else f32)
# ---------------------------------------------------------------------------
def reference_forward(x_nchw, params, num_blocks, stride=1):
    x = jnp.transpose(x_nchw, (0, 2, 3, 1)).astype(jnp.float32)

    def conv(z, w, s):
        return jax.lax.conv_general_dilated(
            z.astype(jnp.bfloat16), w.astype(jnp.bfloat16),
            (s, s), ((1, 1), (1, 1)),
            dimension_numbers=("NHWC", "HWIO", "NHWC"),
            preferred_element_type=jnp.float32)

    def bnrelu(z, g, b, m, v, eps=1e-5):
        return jnp.maximum((z - m) / jnp.sqrt(v + eps) * g + b, 0.0)

    y = conv(x, params["w1"], stride)
    y = jax.lax.reduce_window(y, -jnp.inf, jax.lax.max,
                              (1, 2, 2, 1), (1, 2, 2, 1), "VALID")
    y = bnrelu(y, params["bn1_gamma"], params["bn1_beta"],
               params["bn1_mean"], params["bn1_var"])
    if num_blocks != 0:
        r = bnrelu(conv(y, params["w2"], stride), params["bn2_gamma"],
                   params["bn2_beta"], params["bn2_mean"], params["bn2_var"])
        r = bnrelu(conv(r, params["w3"], 1), params["bn3_gamma"],
                   params["bn3_beta"], params["bn3_mean"], params["bn3_var"])
        y = 2.0 * y + r
    return jnp.transpose(y, (0, 3, 1, 2))


if __name__ == "__main__":
    key = jax.random.PRNGKey(0)
    kx, kp = jax.random.split(key)

    in_planes, planes, num_blocks, stride = 4, 8, 1, 1
    x = jax.random.normal(kx, (2, in_planes, 16, 16), jnp.float32)  # NCHW
    params = init_params(kp, in_planes, planes)

    fwd = jax.jit(basic_block_forward, static_argnums=(2, 3))
    out = jax.block_until_ready(fwd(x, params, num_blocks, stride))
    assert out.shape == (2, planes, 8, 8), out.shape

    ref = jax.block_until_ready(reference_forward(x, params, num_blocks, stride))
    err = float(jnp.max(jnp.abs(out - ref)))
    assert jnp.allclose(out, ref, atol=2e-3, rtol=2e-3), f"max |err| = {err}"

    print("KERNEL_OK")
</pallas_src>

<mosaic_0001>
module attributes {stable_mosaic.version = 11 : i64} {
  func.func @conv_pool_bn_relu_kernel(%arg0: i32, %arg1: memref<4x36x128xbf16, #tpu.memory_space<vmem>>, %arg2: memref<8x36xbf16, #tpu.memory_space<vmem>>, %arg3: memref<8x1xf32, #tpu.memory_space<vmem>>, %arg4: memref<8x1xf32, #tpu.memory_space<vmem>>, %arg5: memref<8x128xf32, #tpu.memory_space<vmem>>) attributes {dimension_semantics = [#tpu.dimension_semantics<parallel>], iteration_bounds = array<i64: 1>, scalar_prefetch = 0 : i64, scratch_operands = 0 : i64, tpu.core_type = #tpu.core_type<tc>, window_params = [{transform_indices = @transform_0, window_bounds = array<i64: 4, 36, 128>}, {pipeline_mode = #tpu.pipeline_mode<synchronous>, transform_indices = @transform_1, window_bounds = array<i64: 8, 36>}, {pipeline_mode = #tpu.pipeline_mode<synchronous>, transform_indices = @transform_2, window_bounds = array<i64: 8, 1>}, {pipeline_mode = #tpu.pipeline_mode<synchronous>, transform_indices = @transform_3, window_bounds = array<i64: 8, 1>}, {transform_indices = @transform_4, window_bounds = array<i64: 8, 128>}]} {
    %c0 = arith.constant 0 : index
    %c0_0 = arith.constant 0 : index
    %0 = vector.load %arg2[%c0, %c0_0] : memref<8x36xbf16, #tpu.memory_space<vmem>>, vector<8x36xbf16>
    %c0_1 = arith.constant 0 : index
    %c0_2 = arith.constant 0 : index
    %c0_3 = arith.constant 0 : index
    %1 = vector.load %arg1[%c0_1, %c0_2, %c0_3] : memref<4x36x128xbf16, #tpu.memory_space<vmem>>, vector<1x36x128xbf16>
    %2 = vector.shape_cast %1 : vector<1x36x128xbf16> to vector<36x128xbf16>
    %cst = arith.constant dense<0.000000e+00> : vector<8x128xf32>
    %3 = tpu.matmul %0, %2, %cst {dimension_numbers = #tpu.dot_dimension_numbers<[1], [0], [0], [1], [0, 0, 1, 1], [], []>} : vector<8x36xbf16>, vector<36x128xbf16>, vector<8x128xf32> -> vector<8x128xf32>
    %c1 = arith.constant 1 : index
    %c0_4 = arith.constant 0 : index
    %c0_5 = arith.constant 0 : index
    %4 = vector.load %arg1[%c1, %c0_4, %c0_5] : memref<4x36x128xbf16, #tpu.memory_space<vmem>>, vector<1x36x128xbf16>
    %5 = vector.shape_cast %4 : vector<1x36x128xbf16> to vector<36x128xbf16>
    %cst_6 = arith.constant dense<0.000000e+00> : vector<8x128xf32>
    %6 = tpu.matmul %0, %5, %cst_6 {dimension_numbers = #tpu.dot_dimension_numbers<[1], [0], [0], [1], [0, 0, 1, 1], [], []>} : vector<8x36xbf16>, vector<36x128xbf16>, vector<8x128xf32> -> vector<8x128xf32>
    %7 = arith.maximumf %3, %6 : vector<8x128xf32>
    %c2 = arith.constant 2 : index
    %c0_7 = arith.constant 0 : index
    %c0_8 = arith.constant 0 : index
    %8 = vector.load %arg1[%c2, %c0_7, %c0_8] : memref<4x36x128xbf16, #tpu.memory_space<vmem>>, vector<1x36x128xbf16>
    %9 = vector.shape_cast %8 : vector<1x36x128xbf16> to vector<36x128xbf16>
    %cst_9 = arith.constant dense<0.000000e+00> : vector<8x128xf32>
    %10 = tpu.matmul %0, %9, %cst_9 {dimension_numbers = #tpu.dot_dimension_numbers<[1], [0], [0], [1], [0, 0, 1, 1], [], []>} : vector<8x36xbf16>, vector<36x128xbf16>, vector<8x128xf32> -> vector<8x128xf32>
    %11 = arith.maximumf %7, %10 : vector<8x128xf32>
    %c3 = arith.constant 3 : index
    %c0_10 = arith.constant 0 : index
    %c0_11 = arith.constant 0 : index
    %12 = vector.load %arg1[%c3, %c0_10, %c0_11] : memref<4x36x128xbf16, #tpu.memory_space<vmem>>, vector<1x36x128xbf16>
    %13 = vector.shape_cast %12 : vector<1x36x128xbf16> to vector<36x128xbf16>
    %cst_12 = arith.constant dense<0.000000e+00> : vector<8x128xf32>
    %14 = tpu.matmul %0, %13, %cst_12 {dimension_numbers = #tpu.dot_dimension_numbers<[1], [0], [0], [1], [0, 0, 1, 1], [], []>} : vector<8x36xbf16>, vector<36x128xbf16>, vector<8x128xf32> -> vector<8x128xf32>
    %15 = arith.maximumf %11, %14 : vector<8x128xf32>
    %c0_13 = arith.constant 0 : index
    %c0_14 = arith.constant 0 : index
    %16 = vector.load %arg3[%c0_13, %c0_14] : memref<8x1xf32, #tpu.memory_space<vmem>>, vector<8x1xf32>
    %17 = vector.broadcast %16 : vector<8x1xf32> to vector<8x128xf32>
    %18 = arith.mulf %15, %17 : vector<8x128xf32>
    %c0_15 = arith.constant 0 : index
    %c0_16 = arith.constant 0 : index
    %19 = vector.load %arg4[%c0_15, %c0_16] : memref<8x1xf32, #tpu.memory_space<vmem>>, vector<8x1xf32>
    %20 = vector.broadcast %19 : vector<8x1xf32> to vector<8x128xf32>
    %21 = arith.addf %18, %20 : vector<8x128xf32>
    %cst_17 = arith.constant 0.000000e+00 : f32
    %22 = vector.broadcast %cst_17 : f32 to vector<8x128xf32>
    %23 = arith.maximumf %21, %22 : vector<8x128xf32>
    %c0_18 = arith.constant 0 : index
    %c0_19 = arith.constant 0 : index
    %24 = vector.load %arg5[%c0_18, %c0_19] : memref<8x128xf32, #tpu.memory_space<vmem>>, vector<8x128xf32>
    tpu.vector_store %arg5[%c0_18, %c0_19], %23 {strides = array<i32>} : memref<8x128xf32, #tpu.memory_space<vmem>>, vector<8x128xf32>,
    return
  }
  func.func @transform_0(%arg0: i32) -> (i32, i32, i32) {
    %c0_i32 = arith.constant 0 : i32
    %c0_i32_0 = arith.constant 0 : i32
    %c0_i32_1 = arith.constant 0 : i32
    return %c0_i32, %c0_i32_0, %arg0 : i32, i32, i32
  }
  func.func @transform_1(%arg0: i32) -> (i32, i32) {
    %c0_i32 = arith.constant 0 : i32
    %c0_i32_0 = arith.constant 0 : i32
    %c0_i32_1 = arith.constant 0 : i32
    return %c0_i32, %c0_i32_0 : i32, i32
  }
  func.func @transform_2(%arg0: i32) -> (i32, i32) {
    %c0_i32 = arith.constant 0 : i32
    %c0_i32_0 = arith.constant 0 : i32
    %c0_i32_1 = arith.constant 0 : i32
    return %c0_i32, %c0_i32_0 : i32, i32
  }
  func.func @transform_3(%arg0: i32) -> (i32, i32) {
    %c0_i32 = arith.constant 0 : i32
    %c0_i32_0 = arith.constant 0 : i32
    %c0_i32_1 = arith.constant 0 : i32
    return %c0_i32, %c0_i32_0 : i32, i32
  }
  func.func @transform_4(%arg0: i32) -> (i32, i32) {
    %c0_i32 = arith.constant 0 : i32
    %c0_i32_0 = arith.constant 0 : i32
    return %c0_i32, %arg0 : i32, i32
  }
}

module attributes {stable_mosaic.version = 11 : i64} {
  func.func @conv_bn_relu_kernel(%arg0: i32, %arg1: memref<72x128xbf16, #tpu.memory_space<vmem>>, %arg2: memref<8x72xbf16, #tpu.memory_space<vmem>>, %arg3: memref<8x1xf32, #tpu.memory_space<vmem>>, %arg4: memref<8x1xf32, #tpu.memory_space<vmem>>, %arg5: memref<8x128xf32, #tpu.memory_space<vmem>>) attributes {dimension_semantics = [#tpu.dimension_semantics<parallel>], iteration_bounds = array<i64: 1>, scalar_prefetch = 0 : i64, scratch_operands = 0 : i64, tpu.core_type = #tpu.core_type<tc>, window_params = [{transform_indices = @transform_0, window_bounds = array<i64: 72, 128>}, {pipeline_mode = #tpu.pipeline_mode<synchronous>, transform_indices = @transform_1, window_bounds = array<i64: 8, 72>}, {pipeline_mode = #tpu.pipeline_mode<synchronous>, transform_indices = @transform_2, window_bounds = array<i64: 8, 1>}, {pipeline_mode = #tpu.pipeline_mode<synchronous>, transform_indices = @transform_3, window_bounds = array<i64: 8, 1>}, {transform_indices = @transform_4, window_bounds = array<i64: 8, 128>}]} {
    %c0 = arith.constant 0 : index
    %c0_0 = arith.constant 0 : index
    %0 = vector.load %arg2[%c0, %c0_0] : memref<8x72xbf16, #tpu.memory_space<vmem>>, vector<8x72xbf16>
    %c0_1 = arith.constant 0 : index
    %c0_2 = arith.constant 0 : index
    %1 = vector.load %arg1[%c0_1, %c0_2] : memref<72x128xbf16, #tpu.memory_space<vmem>>, vector<72x128xbf16>
    %cst = arith.constant dense<0.000000e+00> : vector<8x128xf32>
    %2 = tpu.matmul %0, %1, %cst {dimension_numbers = #tpu.dot_dimension_numbers<[1], [0], [0], [1], [0, 0, 1, 1], [], []>} : vector<8x72xbf16>, vector<72x128xbf16>, vector<8x128xf32> -> vector<8x128xf32>
    %c0_3 = arith.constant 0 : index
    %c0_4 = arith.constant 0 : index
    %3 = vector.load %arg3[%c0_3, %c0_4] : memref<8x1xf32, #tpu.memory_space<vmem>>, vector<8x1xf32>
    %4 = vector.broadcast %3 : vector<8x1xf32> to vector<8x128xf32>
    %5 = arith.mulf %2, %4 : vector<8x128xf32>
    %c0_5 = arith.constant 0 : index
    %c0_6 = arith.constant 0 : index
    %6 = vector.load %arg4[%c0_5, %c0_6] : memref<8x1xf32, #tpu.memory_space<vmem>>, vector<8x1xf32>
    %7 = vector.broadcast %6 : vector<8x1xf32> to vector<8x128xf32>
    %8 = arith.addf %5, %7 : vector<8x128xf32>
    %cst_7 = arith.constant 0.000000e+00 : f32
    %9 = vector.broadcast %cst_7 : f32 to vector<8x128xf32>
    %10 = arith.maximumf %8, %9 : vector<8x128xf32>
    %c0_8 = arith.constant 0 : index
    %c0_9 = arith.constant 0 : index
    %11 = vector.load %arg5[%c0_8, %c0_9] : memref<8x128xf32, #tpu.memory_space<vmem>>, vector<8x128xf32>
    tpu.vector_store %arg5[%c0_8, %c0_9], %10 {strides = array<i32>} : memref<8x128xf32, #tpu.memory_space<vmem>>, vector<8x128xf32>,
    return
  }
  func.func @transform_0(%arg0: i32) -> (i32, i32) {
    %c0_i32 = arith.constant 0 : i32
    %c0_i32_0 = arith.constant 0 : i32
    return %c0_i32, %arg0 : i32, i32
  }
  func.func @transform_1(%arg0: i32) -> (i32, i32) {
    %c0_i32 = arith.constant 0 : i32
    %c0_i32_0 = arith.constant 0 : i32
    %c0_i32_1 = arith.constant 0 : i32
    return %c0_i32, %c0_i32_0 : i32, i32
  }
  func.func @transform_2(%arg0: i32) -> (i32, i32) {
    %c0_i32 = arith.constant 0 : i32
    %c0_i32_0 = arith.constant 0 : i32
    %c0_i32_1 = arith.constant 0 : i32
    return %c0_i32, %c0_i32_0 : i32, i32
  }
  func.func @transform_3(%arg0: i32) -> (i32, i32) {
    %c0_i32 = arith.constant 0 : i32
    %c0_i32_0 = arith.constant 0 : i32
    %c0_i32_1 = arith.constant 0 : i32
    return %c0_i32, %c0_i32_0 : i32, i32
  }
  func.func @transform_4(%arg0: i32) -> (i32, i32) {
    %c0_i32 = arith.constant 0 : i32
    %c0_i32_0 = arith.constant 0 : i32
    return %c0_i32, %arg0 : i32, i32
  }
}

module attributes {stable_mosaic.version = 11 : i64} {
  func.func @conv_bn_relu_residual_kernel(%arg0: i32, %arg1: memref<72x128xbf16, #tpu.memory_space<vmem>>, %arg2: memref<8x72xbf16, #tpu.memory_space<vmem>>, %arg3: memref<8x1xf32, #tpu.memory_space<vmem>>, %arg4: memref<8x1xf32, #tpu.memory_space<vmem>>, %arg5: memref<8x128xf32, #tpu.memory_space<vmem>>, %arg6: memref<8x128xf32, #tpu.memory_space<vmem>>) attributes {dimension_semantics = [#tpu.dimension_semantics<parallel>], iteration_bounds = array<i64: 1>, scalar_prefetch = 0 : i64, scratch_operands = 0 : i64, tpu.core_type = #tpu.core_type<tc>, window_params = [{transform_indices = @transform_0, window_bounds = array<i64: 72, 128>}, {pipeline_mode = #tpu.pipeline_mode<synchronous>, transform_indices = @transform_1, window_bounds = array<i64: 8, 72>}, {pipeline_mode = #tpu.pipeline_mode<synchronous>, transform_indices = @transform_2, window_bounds = array<i64: 8, 1>}, {pipeline_mode = #tpu.pipeline_mode<synchronous>, transform_indices = @transform_3, window_bounds = array<i64: 8, 1>}, {transform_indices = @transform_4, window_bounds = array<i64: 8, 128>}, {transform_indices = @transform_5, window_bounds = array<i64: 8, 128>}]} {
    %c0 = arith.constant 0 : index
    %c0_0 = arith.constant 0 : index
    %0 = vector.load %arg2[%c0, %c0_0] : memref<8x72xbf16, #tpu.memory_space<vmem>>, vector<8x72xbf16>
    %c0_1 = arith.constant 0 : index
    %c0_2 = arith.constant 0 : index
    %1 = vector.load %arg1[%c0_1, %c0_2] : memref<72x128xbf16, #tpu.memory_space<vmem>>, vector<72x128xbf16>
    %cst = arith.constant dense<0.000000e+00> : vector<8x128xf32>
    %2 = tpu.matmul %0, %1, %cst {dimension_numbers = #tpu.dot_dimension_numbers<[1], [0], [0], [1], [0, 0, 1, 1], [], []>} : vector<8x72xbf16>, vector<72x128xbf16>, vector<8x128xf32> -> vector<8x128xf32>
    %c0_3 = arith.constant 0 : index
    %c0_4 = arith.constant 0 : index
    %3 = vector.load %arg3[%c0_3, %c0_4] : memref<8x1xf32, #tpu.memory_space<vmem>>, vector<8x1xf32>
    %4 = vector.broadcast %3 : vector<8x1xf32> to vector<8x128xf32>
    %5 = arith.mulf %2, %4 : vector<8x128xf32>
    %c0_5 = arith.constant 0 : index
    %c0_6 = arith.constant 0 : index
    %6 = vector.load %arg4[%c0_5, %c0_6] : memref<8x1xf32, #tpu.memory_space<vmem>>, vector<8x1xf32>
    %7 = vector.broadcast %6 : vector<8x1xf32> to vector<8x128xf32>
    %8 = arith.addf %5, %7 : vector<8x128xf32>
    %cst_7 = arith.constant 0.000000e+00 : f32
    %9 = vector.broadcast %cst_7 : f32 to vector<8x128xf32>
    %10 = arith.maximumf %8, %9 : vector<8x128xf32>
    %c0_8 = arith.constant 0 : index
    %c0_9 = arith.constant 0 : index
    %11 = vector.load %arg5[%c0_8, %c0_9] : memref<8x128xf32, #tpu.memory_space<vmem>>, vector<8x128xf32>
    %cst_10 = arith.constant 2.000000e+00 : f32
    %12 = vector.broadcast %cst_10 : f32 to vector<8x128xf32>
    %13 = arith.mulf %12, %11 : vector<8x128xf32>
    %14 = arith.addf %13, %10 : vector<8x128xf32>
    %c0_11 = arith.constant 0 : index
    %c0_12 = arith.constant 0 : index
    %15 = vector.load %arg6[%c0_11, %c0_12] : memref<8x128xf32, #tpu.memory_space<vmem>>, vector<8x128xf32>
    tpu.vector_store %arg6[%c0_11, %c0_12], %14 {strides = array<i32>} : memref<8x128xf32, #tpu.memory_space<vmem>>, vector<8x128xf32>,
    return
  }
  func.func @transform_0(%arg0: i32) -> (i32, i32) {
    %c0_i32 = arith.constant 0 : i32
    %c0_i32_0 = arith.constant 0 : i32
    return %c0_i32, %arg0 : i32, i32
  }
  func.func @transform_1(%arg0: i32) -> (i32, i32) {
    %c0_i32 = arith.constant 0 : i32
    %c0_i32_0 = arith.constant 0 : i32
    %c0_i32_1 = arith.constant 0 : i32
    return %c0_i32, %c0_i32_0 : i32, i32
  }
  func.func @transform_2(%arg0: i32) -> (i32, i32) {
    %c0_i32 = arith.constant 0 : i32
    %c0_i32_0 = arith.constant 0 : i32
    %c0_i32_1 = arith.constant 0 : i32
    return %c0_i32, %c0_i32_0 : i32, i32
  }
  func.func @transform_3(%arg0: i32) -> (i32, i32) {
    %c0_i32 = arith.constant 0 : i32
    %c0_i32_0 = arith.constant 0 : i32
    %c0_i32_1 = arith.constant 0 : i32
    return %c0_i32, %c0_i32_0 : i32, i32
  }
  func.func @transform_4(%arg0: i32) -> (i32, i32) {
    %c0_i32 = arith.constant 0 : i32
    %c0_i32_0 = arith.constant 0 : i32
    return %c0_i32, %arg0 : i32, i32
  }
  func.func @transform_5(%arg0: i32) -> (i32, i32) {
    %c0_i32 = arith.constant 0 : i32
    %c0_i32_0 = arith.constant 0 : i32
    return %c0_i32, %arg0 : i32, i32
  }
}

</mosaic_0001>

<llo_original>
// kernel: basic_block_forward.3
$region0: #{basic_block_forward.3}
  #allocation0 [shape = 'u32[]', space=smem, size = 0x4, offset = 0x4, fixed_abs, tag = 'smem constant byte address 0x4 - core index']
  #allocation1 [shape = 'u32[144,128]{1,0:T(1,128)}', space=vmem, size = 0x12000, scoped, tag = 'internal scratch']
  %s0 = inlined_call_operand.vmem [shape: bf16[4,36,128], index: 0, kind: input, shape index: {}]
  %s1 = inlined_call_operand.vmem [shape: bf16[8,36], index: 1, kind: input, shape index: {}]
  %s2 = inlined_call_operand.vmem [shape: f32[8,1], index: 2, kind: input, shape index: {}]
  %s3 = inlined_call_operand.vmem [shape: f32[8,1], index: 3, kind: input, shape index: {}]
  %s4 = inlined_call_operand.vmem [shape: f32[8,128], index: 4, kind: output, shape index: {}]
  %s5 = sld [smem:[#allocation0]]
  $region26: #{basic_block_forward.3} parent=0
    _
  %s7 = ssub.s32 1, %s5
  %s8 = scalar_select 0, %s7, %s5
  // Predicated region
  $region2: #{basic_block_forward.3} parent=0 // pred_check
    _
  $region3: #{basic_block_forward.3} parent=0 // pred_check_branch
    %10 = sbr.rel (0) target = $region5
  $region4: #{basic_block_forward.3} parent=0 // pred_region
    _
  $region5: #{basic_block_forward.3} parent=0 // pred_fallthru
    _
  // Predicated region
  $region6: #{basic_block_forward.3} parent=0 // pred_check
    _
  $region7: #{basic_block_forward.3} parent=0 // pred_check_branch
    %12 = sbr.rel (0) target = $region9
  $region8: #{basic_block_forward.3} parent=0 // pred_region
    _
  $region9: #{basic_block_forward.3} parent=0 // pred_fallthru
    _
  // Predicated region
  $region10: #{basic_block_forward.3} parent=0 // pred_check
    _
  $region11: #{basic_block_forward.3} parent=0 // pred_check_branch
    %14 = sbr.rel (0) target = $region13
  $region12: #{basic_block_forward.3} parent=0 // pred_region
    _
  $region13: #{basic_block_forward.3} parent=0 // pred_fallthru
    _
  // Predicated region
  $region14: #{basic_block_forward.3} parent=0 // pred_check
    _
  $region15: #{basic_block_forward.3} parent=0 // pred_check_branch
    %16 = sbr.rel (0) target = $region17
  $region16: #{basic_block_forward.3} parent=0 // pred_region
    _
  $region17: #{basic_block_forward.3} parent=0 // pred_fallthru
    _
  %v18 = vld [vmem:[%s1] sm:$0xf]
  %v19 = vld [vmem:[%s0] sm:$0xf]
  %v20 = vld [vmem:[%s0 + $0x4] sm:$0xf]
  %v21 = vld [vmem:[%s0 + $0x8] sm:$0xf]
  %v22 = vld [vmem:[%s0 + $0xc] sm:$0xf]
  %v23 = vld [vmem:[%s0 + $0x10] sm:$0x3]
  %v29 = vunpack.c.l.b16 %v19
  %v30 = vunpack.c.l.b16 %v20
  %v31 = vunpack.c.l.b16 %v21
  %v32 = vunpack.c.l.b16 %v22
  %v33 = vunpack.c.l.b16 %v23
  %v34 = vpack.c.b16 %v30, %v29
  %v35 = vpack.c.b16 %v32, %v31
  %v36 = vpack.c.b16 %v33, %v33
  %vm39 = vcmask 293888
  %v41 = vsel %vm39, %v18, 0
  %vm43 = vcmask 1041408
  %v45 = vsel %vm43, %v36, 0
  %47 = vmatprep.subr.bf16.mxu0 0
  %48 = vmatpush1.bf16.msra.mxu0 %v34
  %49 = vmatprep.subr.bf16.mxu0 0
  %50 = vmatpush1.bf16.msra.mxu0 %v35
  %51 = vmatprep.subr.bf16.mxu0 0
  %52 = vmatpush1.bf16.msra.mxu0 %v45
  %53 = vmatprep.subr.bf16.mxu0 0
  %54 = vmatpush1.bf16.msra.mxu0 0
  %55 = vmatprep.subr.bf16.mxu0 0
  %56 = vmatpush1.bf16.msra.mxu0 0
  %57 = vmatprep.subr.bf16.mxu0 0
  %58 = vmatpush1.bf16.msra.mxu0 0
  %59 = vmatprep.subr.bf16.mxu0 0
  %60 = vmatpush1.bf16.msra.mxu0 0
  %61 = vmatprep.subr.bf16.mxu0 0
  %62 = vmatpush1.bf16.msra.mxu0 0
  %63 = vmatprep.subr.bf16.mxu0 0
  %64 = vmatpush1.bf16.msra.mxu0 0
  %65 = vmatprep.subr.bf16.mxu0 0
  %66 = vmatpush1.bf16.msra.mxu0 0
  %67 = vmatprep.subr.bf16.mxu0 0
  %68 = vmatpush1.bf16.msra.mxu0 0
  %69 = vmatprep.subr.bf16.mxu0 0
  %70 = vmatpush1.bf16.msra.mxu0 0
  %71 = vmatprep.subr.bf16.mxu0 0
  %72 = vmatpush1.bf16.msra.mxu0 0
  %73 = vmatprep.subr.bf16.mxu0 0
  %74 = vmatpush1.bf16.msra.mxu0 0
  %75 = vmatprep.subr.bf16.mxu0 0
  %76 = vmatpush1.bf16.msra.mxu0 0
  %77 = vmatprep.subr.bf16.mxu0 0
  %78 = vmatpush1.bf16.msra.mxu0 0
  %79 = vmatprep.mubr.bf16.mxu0 0
  %80 = vmatmul.mubr.bf16.gmra.mrb[0].mxu0 %v41
  %v81 = vpop.f32.mrb[0].mxu0
  %v82 = vadd.f32 0.0, %v81
  %v83 = vpop.f32.mrb[0].mxu0
  %v84 = vpop.f32.mrb[0].mxu0
  %v85 = vpop.f32.mrb[0].mxu0
  %86 = vdwg.mxu0
  %s87 = scalar_lea.vmem %s0, 20
  %v88 = vld [vmem:[%s87] sm:$0xf]
  %v89 = vld [vmem:[%s87 + $0x4] sm:$0xf]
  %v90 = vld [vmem:[%s87 + $0x8] sm:$0xf]
  %v91 = vld [vmem:[%s87 + $0xc] sm:$0xf]
  %v92 = vld [vmem:[%s87 + $0x10] sm:$0x3]
  %v98 = vunpack.c.l.b16 %v88
  %v99 = vunpack.c.l.b16 %v89
  %v100 = vunpack.c.l.b16 %v90
  %v101 = vunpack.c.l.b16 %v91
  %v102 = vunpack.c.l.b16 %v92
  %v103 = vpack.c.b16 %v99, %v98
  %v104 = vpack.c.b16 %v101, %v100
  %v105 = vpack.c.b16 %v102, %v102
  %v109 = vsel %vm43, %v105, 0
  %111 = vmatprep.subr.bf16.mxu0 0
  %112 = vmatpush1.bf16.msra.mxu0 %v103
  %113 = vmatprep.subr.bf16.mxu0 0
  %114 = vmatpush1.bf16.msra.mxu0 %v104
  %115 = vmatprep.subr.bf16.mxu0 0
  %116 = vmatpush1.bf16.msra.mxu0 %v109
  %117 = vmatprep.subr.bf16.mxu0 0
  %118 = vmatpush1.bf16.msra.mxu0 0
  %119 = vmatprep.subr.bf16.mxu0 0
  %120 = vmatpush1.bf16.msra.mxu0 0
  %121 = vmatprep.subr.bf16.mxu0 0
  %122 = vmatpush1.bf16.msra.mxu0 0
  %123 = vmatprep.subr.bf16.mxu0 0
  %124 = vmatpush1.bf16.msra.mxu0 0
  %125 = vmatprep.subr.bf16.mxu0 0
  %126 = vmatpush1.bf16.msra.mxu0 0
  %127 = vmatprep.subr.bf16.mxu0 0
  %128 = vmatpush1.bf16.msra.mxu0 0
  %129 = vmatprep.subr.bf16.mxu0 0
  %130 = vmatpush1.bf16.msra.mxu0 0
  %131 = vmatprep.subr.bf16.mxu0 0
  %132 = vmatpush1.bf16.msra.mxu0 0
  %133 = vmatprep.subr.bf16.mxu0 0
  %134 = vmatpush1.bf16.msra.mxu0 0
  %135 = vmatprep.subr.bf16.mxu0 0
  %136 = vmatpush1.bf16.msra.mxu0 0
  %137 = vmatprep.subr.bf16.mxu0 0
  %138 = vmatpush1.bf16.msra.mxu0 0
  %139 = vmatprep.subr.bf16.mxu0 0
  %140 = vmatpush1.bf16.msra.mxu0 0
  %141 = vmatprep.subr.bf16.mxu0 0
  %142 = vmatpush1.bf16.msra.mxu0 0
  %143 = vmatprep.mubr.bf16.mxu0 0
  %144 = vmatmul.mubr.bf16.gmra.mrb[0].mxu0 %v41
  %v145 = vpop.f32.mrb[0].mxu0
  %v146 = vadd.f32 0.0, %v145
  %v147 = vpop.f32.mrb[0].mxu0
  %v148 = vpop.f32.mrb[0].mxu0
  %v149 = vpop.f32.mrb[0].mxu0
  %150 = vdwg.mxu0
  %v151 = vmax.f32 %v82, %v146
  %s152 = scalar_lea.vmem %s0, 40
  %v153 = vld [vmem:[%s152] sm:$0xf]
  %v154 = vld [vmem:[%s152 + $0x4] sm:$0xf]
  %v155 = vld [vmem:[%s152 + $0x8] sm:$0xf]
  %v156 = vld [vmem:[%s152 + $0xc] sm:$0xf]
  %v157 = vld [vmem:[%s152 + $0x10] sm:$0x3]
  %v163 = vunpack.c.l.b16 %v153
  %v164 = vunpack.c.l.b16 %v154
  %v165 = vunpack.c.l.b16 %v155
  %v166 = vunpack.c.l.b16 %v156
  %v167 = vunpack.c.l.b16 %v157
  %v168 = vpack.c.b16 %v164, %v163
  %v169 = vpack.c.b16 %v166, %v165
  %v170 = vpack.c.b16 %v167, %v167
  %v174 = vsel %vm43, %v170, 0
  %176 = vmatprep.subr.bf16.mxu0 0
  %177 = vmatpush1.bf16.msra.mxu0 %v168
  %178 = vmatprep.subr.bf16.mxu0 0
  %179 = vmatpush1.bf16.msra.mxu0 %v169
  %180 = vmatprep.subr.bf16.mxu0 0
  %181 = vmatpush1.bf16.msra.mxu0 %v174
  %182 = vmatprep.subr.bf16.mxu0 0
  %183 = vmatpush1.bf16.msra.mxu0 0
  %184 = vmatprep.subr.bf16.mxu0 0
  %185 = vmatpush1.bf16.msra.mxu0 0
  %186 = vmatprep.subr.bf16.mxu0 0
  %187 = vmatpush1.bf16.msra.mxu0 0
  %188 = vmatprep.subr.bf16.mxu0 0
  %189 = vmatpush1.bf16.msra.mxu0 0
  %190 = vmatprep.subr.bf16.mxu0 0
  %191 = vmatpush1.bf16.msra.mxu0 0
  %192 = vmatprep.subr.bf16.mxu0 0
  %193 = vmatpush1.bf16.msra.mxu0 0
  %194 = vmatprep.subr.bf16.mxu0 0
  %195 = vmatpush1.bf16.msra.mxu0 0
  %196 = vmatprep.subr.bf16.mxu0 0
  %197 = vmatpush1.bf16.msra.mxu0 0
  %198 = vmatprep.subr.bf16.mxu0 0
  %199 = vmatpush1.bf16.msra.mxu0 0
  %200 = vmatprep.subr.bf16.mxu0 0
  %201 = vmatpush1.bf16.msra.mxu0 0
  %202 = vmatprep.subr.bf16.mxu0 0
  %203 = vmatpush1.bf16.msra.mxu0 0
  %204 = vmatprep.subr.bf16.mxu0 0
  %205 = vmatpush1.bf16.msra.mxu0 0
  %206 = vmatprep.subr.bf16.mxu0 0
  %207 = vmatpush1.bf16.msra.mxu0 0
  %208 = vmatprep.mubr.bf16.mxu0 0
  %209 = vmatmul.mubr.bf16.gmra.mrb[0].mxu0 %v41
  %v210 = vpop.f32.mrb[0].mxu0
  %v211 = vadd.f32 0.0, %v210
  %v212 = vpop.f32.mrb[0].mxu0
  %v213 = vpop.f32.mrb[0].mxu0
  %v214 = vpop.f32.mrb[0].mxu0
  %215 = vdwg.mxu0
  %v216 = vmax.f32 %v151, %v211
  %s217 = scalar_lea.vmem %s0, 60
  %v218 = vld [vmem:[%s217] sm:$0xf]
  %v219 = vld [vmem:[%s217 + $0x4] sm:$0xf]
  %v220 = vld [vmem:[%s217 + $0x8] sm:$0xf]
  %v221 = vld [vmem:[%s217 + $0xc] sm:$0xf]
  %v222 = vld [vmem:[%s217 + $0x10] sm:$0x3]
  %v228 = vunpack.c.l.b16 %v218
  %v229 = vunpack.c.l.b16 %v219
  %v230 = vunpack.c.l.b16 %v220
  %v231 = vunpack.c.l.b16 %v221
  %v232 = vunpack.c.l.b16 %v222
  %v233 = vpack.c.b16 %v229, %v228
  %v234 = vpack.c.b16 %v231, %v230
  %v235 = vpack.c.b16 %v232, %v232
  %v239 = vsel %vm43, %v235, 0
  %241 = vmatprep.subr.bf16.mxu0 0
  %242 = vmatpush1.bf16.msra.mxu0 %v233
  %243 = vmatprep.subr.bf16.mxu0 0
  %244 = vmatpush1.bf16.msra.mxu0 %v234
  %245 = vmatprep.subr.bf16.mxu0 0
  %246 = vmatpush1.bf16.msra.mxu0 %v239
  %247 = vmatprep.subr.bf16.mxu0 0
  %248 = vmatpush1.bf16.msra.mxu0 0
  %249 = vmatprep.subr.bf16.mxu0 0
  %250 = vmatpush1.bf16.msra.mxu0 0
  %251 = vmatprep.subr.bf16.mxu0 0
  %252 = vmatpush1.bf16.msra.mxu0 0
  %253 = vmatprep.subr.bf16.mxu0 0
  %254 = vmatpush1.bf16.msra.mxu0 0
  %255 = vmatprep.subr.bf16.mxu0 0
  %256 = vmatpush1.bf16.msra.mxu0 0
  %257 = vmatprep.subr.bf16.mxu0 0
  %258 = vmatpush1.bf16.msra.mxu0 0
  %259 = vmatprep.subr.bf16.mxu0 0
  %260 = vmatpush1.bf16.msra.mxu0 0
  %261 = vmatprep.subr.bf16.mxu0 0
  %262 = vmatpush1.bf16.msra.mxu0 0
  %263 = vmatprep.subr.bf16.mxu0 0
  %264 = vmatpush1.bf16.msra.mxu0 0
  %265 = vmatprep.subr.bf16.mxu0 0
  %266 = vmatpush1.bf16.msra.mxu0 0
  %267 = vmatprep.subr.bf16.mxu0 0
  %268 = vmatpush1.bf16.msra.mxu0 0
  %269 = vmatprep.subr.bf16.mxu0 0
  %270 = vmatpush1.bf16.msra.mxu0 0
  %271 = vmatprep.subr.bf16.mxu0 0
  %272 = vmatpush1.bf16.msra.mxu0 0
  %273 = vmatprep.mubr.bf16.mxu0 0
  %274 = vmatmul.mubr.bf16.gmra.mrb[0].mxu0 %v41
  %v275 = vpop.f32.mrb[0].mxu0
  %v276 = vadd.f32 0.0, %v275
  %v277 = vpop.f32.mrb[0].mxu0
  %v278 = vpop.f32.mrb[0].mxu0
  %v279 = vpop.f32.mrb[0].mxu0
  %280 = vdwg.mxu0
  %v281 = vmax.f32 %v216, %v276
  %v282 = vld [vmem:[%s2] sm:$0xff]
  %284 = vset.pattern.permute.xlu0 0
  %285 = vperm.xlu0 %284, %v282
  %v286 = vpop.permute.xlu0 %285
  %v288 = vmul.f32 %v281, %v286
  %v289 = vld [vmem:[%s3] sm:$0xff]
  %291 = vset.pattern.permute.xlu0 0
  %292 = vperm.xlu0 %291, %v289
  %v293 = vpop.permute.xlu0 %292
  %v295 = vadd.f32 %v288, %v293
  %v296 = vmax.f32 %v295, 0.0
  %297 = vst [vmem:[%s4] sm:$0xff] %v296
  // Predicated region
  $region18: #{basic_block_forward.3} parent=0 // pred_check
    _
  $region19: #{basic_block_forward.3} parent=0 // pred_check_branch
    %299 = sbr.rel (0) target = $region21
  $region20: #{basic_block_forward.3} parent=0 // pred_region
    _
  $region21: #{basic_block_forward.3} parent=0 // pred_fallthru
    _
  // Predicated region
  $region22: #{basic_block_forward.3} parent=0 // pred_check
    _
  $region23: #{basic_block_forward.3} parent=0 // pred_check_branch
    %301 = sbr.rel (0) target = $region25
  $region24: #{basic_block_forward.3} parent=0 // pred_region
    _
  $region25: #{basic_block_forward.3} parent=0 // pred_fallthru
    _

// kernel: basic_block_forward.4
$region0: #{basic_block_forward.4}
  #allocation0 [shape = 'u32[]', space=smem, size = 0x4, offset = 0x4, fixed_abs, tag = 'smem constant byte address 0x4 - core index']
  #allocation1 [shape = 'u32[144,128]{1,0:T(1,128)}', space=vmem, size = 0x12000, scoped, tag = 'internal scratch']
  %s0 = inlined_call_operand.vmem [shape: bf16[72,128], index: 0, kind: input, shape index: {}]
  %s1 = inlined_call_operand.vmem [shape: bf16[8,72], index: 1, kind: input, shape index: {}]
  %s2 = inlined_call_operand.vmem [shape: f32[8,1], index: 2, kind: input, shape index: {}]
  %s3 = inlined_call_operand.vmem [shape: f32[8,1], index: 3, kind: input, shape index: {}]
  %s4 = inlined_call_operand.vmem [shape: f32[8,128], index: 4, kind: output, shape index: {}]
  %s5 = sld [smem:[#allocation0]]
  $region26: #{basic_block_forward.4} parent=0
    _
  %s7 = ssub.s32 1, %s5
  %s8 = scalar_select 0, %s7, %s5
  // Predicated region
  $region2: #{basic_block_forward.4} parent=0 // pred_check
    _
  $region3: #{basic_block_forward.4} parent=0 // pred_check_branch
    %10 = sbr.rel (0) target = $region5
  $region4: #{basic_block_forward.4} parent=0 // pred_region
    _
  $region5: #{basic_block_forward.4} parent=0 // pred_fallthru
    _
  // Predicated region
  $region6: #{basic_block_forward.4} parent=0 // pred_check
    _
  $region7: #{basic_block_forward.4} parent=0 // pred_check_branch
    %12 = sbr.rel (0) target = $region9
  $region8: #{basic_block_forward.4} parent=0 // pred_region
    _
  $region9: #{basic_block_forward.4} parent=0 // pred_fallthru
    _
  // Predicated region
  $region10: #{basic_block_forward.4} parent=0 // pred_check
    _
  $region11: #{basic_block_forward.4} parent=0 // pred_check_branch
    %14 = sbr.rel (0) target = $region13
  $region12: #{basic_block_forward.4} parent=0 // pred_region
    _
  $region13: #{basic_block_forward.4} parent=0 // pred_fallthru
    _
  // Predicated region
  $region14: #{basic_block_forward.4} parent=0 // pred_check
    _
  $region15: #{basic_block_forward.4} parent=0 // pred_check_branch
    %16 = sbr.rel (0) target = $region17
  $region16: #{basic_block_forward.4} parent=0 // pred_region
    _
  $region17: #{basic_block_forward.4} parent=0 // pred_fallthru
    _
  %v18 = vld [vmem:[%s1] sm:$0xf]
  %v19 = vld [vmem:[%s0] sm:$0xf]
  %v20 = vld [vmem:[%s0 + $0x4] sm:$0xf]
  %v21 = vld [vmem:[%s0 + $0x8] sm:$0xf]
  %v22 = vld [vmem:[%s0 + $0xc] sm:$0xf]
  %v23 = vld [vmem:[%s0 + $0x10] sm:$0xf]
  %v24 = vld [vmem:[%s0 + $0x14] sm:$0xf]
  %v25 = vld [vmem:[%s0 + $0x18] sm:$0xf]
  %v26 = vld [vmem:[%s0 + $0x1c] sm:$0xf]
  %v27 = vld [vmem:[%s0 + $0x20] sm:$0xf]
  %v37 = vunpack.c.l.b16 %v19
  %v38 = vunpack.c.l.b16 %v20
  %v39 = vunpack.c.l.b16 %v21
  %v40 = vunpack.c.l.b16 %v22
  %v41 = vunpack.c.l.b16 %v23
  %v42 = vunpack.c.l.b16 %v24
  %v43 = vunpack.c.l.b16 %v25
  %v44 = vunpack.c.l.b16 %v26
  %v45 = vunpack.c.l.b16 %v27
  %v46 = vpack.c.b16 %v38, %v37
  %v47 = vpack.c.b16 %v40, %v39
  %v48 = vpack.c.b16 %v42, %v41
  %v49 = vpack.c.b16 %v44, %v43
  %v50 = vpack.c.b16 %v45, %v45
  %vm55 = vcmask 588800
  %v57 = vsel %vm55, %v18, 0
  %vm59 = vcmask 1043456
  %v61 = vsel %vm59, %v50, 0
  %63 = vmatprep.subr.bf16.mxu0 0
  %64 = vmatpush1.bf16.msra.mxu0 %v46
  %65 = vmatprep.subr.bf16.mxu0 0
  %66 = vmatpush1.bf16.msra.mxu0 %v47
  %67 = vmatprep.subr.bf16.mxu0 0
  %68 = vmatpush1.bf16.msra.mxu0 %v48
  %69 = vmatprep.subr.bf16.mxu0 0
  %70 = vmatpush1.bf16.msra.mxu0 %v49
  %71 = vmatprep.subr.bf16.mxu0 0
  %72 = vmatpush1.bf16.msra.mxu0 %v61
  %73 = vmatprep.subr.bf16.mxu0 0
  %74 = vmatpush1.bf16.msra.mxu0 0
  %75 = vmatprep.subr.bf16.mxu0 0
  %76 = vmatpush1.bf16.msra.mxu0 0
  %77 = vmatprep.subr.bf16.mxu0 0
  %78 = vmatpush1.bf16.msra.mxu0 0
  %79 = vmatprep.subr.bf16.mxu0 0
  %80 = vmatpush1.bf16.msra.mxu0 0
  %81 = vmatprep.subr.bf16.mxu0 0
  %82 = vmatpush1.bf16.msra.mxu0 0
  %83 = vmatprep.subr.bf16.mxu0 0
  %84 = vmatpush1.bf16.msra.mxu0 0
  %85 = vmatprep.subr.bf16.mxu0 0
  %86 = vmatpush1.bf16.msra.mxu0 0
  %87 = vmatprep.subr.bf16.mxu0 0
  %88 = vmatpush1.bf16.msra.mxu0 0
  %89 = vmatprep.subr.bf16.mxu0 0
  %90 = vmatpush1.bf16.msra.mxu0 0
  %91 = vmatprep.subr.bf16.mxu0 0
  %92 = vmatpush1.bf16.msra.mxu0 0
  %93 = vmatprep.subr.bf16.mxu0 0
  %94 = vmatpush1.bf16.msra.mxu0 0
  %95 = vmatprep.mubr.bf16.mxu0 0
  %96 = vmatmul.mubr.bf16.gmra.mrb[0].mxu0 %v57
  %v97 = vpop.f32.mrb[0].mxu0
  %v98 = vadd.f32 0.0, %v97
  %v99 = vpop.f32.mrb[0].mxu0
  %v100 = vpop.f32.mrb[0].mxu0
  %v101 = vpop.f32.mrb[0].mxu0
  %102 = vdwg.mxu0
  %v103 = vld [vmem:[%s2] sm:$0xff]
  %105 = vset.pattern.permute.xlu0 0
  %106 = vperm.xlu0 %105, %v103
  %v107 = vpop.permute.xlu0 %106
  %v109 = vmul.f32 %v98, %v107
  %v110 = vld [vmem:[%s3] sm:$0xff]
  %112 = vset.pattern.permute.xlu0 0
  %113 = vperm.xlu0 %112, %v110
  %v114 = vpop.permute.xlu0 %113
  %v116 = vadd.f32 %v109, %v114
  %v117 = vmax.f32 %v116, 0.0
  %118 = vst [vmem:[%s4] sm:$0xff] %v117
  // Predicated region
  $region18: #{basic_block_forward.4} parent=0 // pred_check
    _
  $region19: #{basic_block_forward.4} parent=0 // pred_check_branch
    %120 = sbr.rel (0) target = $region21
  $region20: #{basic_block_forward.4} parent=0 // pred_region
    _
  $region21: #{basic_block_forward.4} parent=0 // pred_fallthru
    _
  // Predicated region
  $region22: #{basic_block_forward.4} parent=0 // pred_check
    _
  $region23: #{basic_block_forward.4} parent=0 // pred_check_branch
    %122 = sbr.rel (0) target = $region25
  $region24: #{basic_block_forward.4} parent=0 // pred_region
    _
  $region25: #{basic_block_forward.4} parent=0 // pred_fallthru
    _

// kernel: basic_block_forward.5
$region0: #{basic_block_forward.5}
  #allocation0 [shape = 'u32[]', space=smem, size = 0x4, offset = 0x4, fixed_abs, tag = 'smem constant byte address 0x4 - core index']
  #allocation1 [shape = 'u32[144,128]{1,0:T(1,128)}', space=vmem, size = 0x12000, scoped, tag = 'internal scratch']
  %s0 = inlined_call_operand.vmem [shape: bf16[72,128], index: 0, kind: input, shape index: {}]
  %s1 = inlined_call_operand.vmem [shape: bf16[8,72], index: 1, kind: input, shape index: {}]
  %s2 = inlined_call_operand.vmem [shape: f32[8,1], index: 2, kind: input, shape index: {}]
  %s3 = inlined_call_operand.vmem [shape: f32[8,1], index: 3, kind: input, shape index: {}]
  %s4 = inlined_call_operand.vmem [shape: f32[8,128], index: 4, kind: input, shape index: {}]
  %s5 = inlined_call_operand.vmem [shape: f32[8,128], index: 5, kind: output, shape index: {}]
  %s6 = sld [smem:[#allocation0]]
  $region30: #{basic_block_forward.5} parent=0
    _
  %s8 = ssub.s32 1, %s6
  %s9 = scalar_select 0, %s8, %s6
  // Predicated region
  $region2: #{basic_block_forward.5} parent=0 // pred_check
    _
  $region3: #{basic_block_forward.5} parent=0 // pred_check_branch
    %11 = sbr.rel (0) target = $region5
  $region4: #{basic_block_forward.5} parent=0 // pred_region
    _
  $region5: #{basic_block_forward.5} parent=0 // pred_fallthru
    _
  // Predicated region
  $region6: #{basic_block_forward.5} parent=0 // pred_check
    _
  $region7: #{basic_block_forward.5} parent=0 // pred_check_branch
    %13 = sbr.rel (0) target = $region9
  $region8: #{basic_block_forward.5} parent=0 // pred_region
    _
  $region9: #{basic_block_forward.5} parent=0 // pred_fallthru
    _
  // Predicated region
  $region10: #{basic_block_forward.5} parent=0 // pred_check
    _
  $region11: #{basic_block_forward.5} parent=0 // pred_check_branch
    %15 = sbr.rel (0) target = $region13
  $region12: #{basic_block_forward.5} parent=0 // pred_region
    _
  $region13: #{basic_block_forward.5} parent=0 // pred_fallthru
    _
  // Predicated region
  $region14: #{basic_block_forward.5} parent=0 // pred_check
    _
  $region15: #{basic_block_forward.5} parent=0 // pred_check_branch
    %17 = sbr.rel (0) target = $region17
  $region16: #{basic_block_forward.5} parent=0 // pred_region
    _
  $region17: #{basic_block_forward.5} parent=0 // pred_fallthru
    _
  // Predicated region
  $region18: #{basic_block_forward.5} parent=0 // pred_check
    _
  $region19: #{basic_block_forward.5} parent=0 // pred_check_branch
    %19 = sbr.rel (0) target = $region21
  $region20: #{basic_block_forward.5} parent=0 // pred_region
    _
  $region21: #{basic_block_forward.5} parent=0 // pred_fallthru
    _
  %v21 = vld [vmem:[%s1] sm:$0xf]
  %v22 = vld [vmem:[%s0] sm:$0xf]
  %v23 = vld [vmem:[%s0 + $0x4] sm:$0xf]
  %v24 = vld [vmem:[%s0 + $0x8] sm:$0xf]
  %v25 = vld [vmem:[%s0 + $0xc] sm:$0xf]
  %v26 = vld [vmem:[%s0 + $0x10] sm:$0xf]
  %v27 = vld [vmem:[%s0 + $0x14] sm:$0xf]
  %v28 = vld [vmem:[%s0 + $0x18] sm:$0xf]
  %v29 = vld [vmem:[%s0 + $0x1c] sm:$0xf]
  %v30 = vld [vmem:[%s0 + $0x20] sm:$0xf]
  %v40 = vunpack.c.l.b16 %v22
  %v41 = vunpack.c.l.b16 %v23
  %v42 = vunpack.c.l.b16 %v24
  %v43 = vunpack.c.l.b16 %v25
  %v44 = vunpack.c.l.b16 %v26
  %v45 = vunpack.c.l.b16 %v27
  %v46 = vunpack.c.l.b16 %v28
  %v47 = vunpack.c.l.b16 %v29
  %v48 = vunpack.c.l.b16 %v30
  %v49 = vpack.c.b16 %v41, %v40
  %v50 = vpack.c.b16 %v43, %v42
  %v51 = vpack.c.b16 %v45, %v44
  %v52 = vpack.c.b16 %v47, %v46
  %v53 = vpack.c.b16 %v48, %v48
  %vm58 = vcmask 588800
  %v60 = vsel %vm58, %v21, 0
  %vm62 = vcmask 1043456
  %v64 = vsel %vm62, %v53, 0
  %66 = vmatprep.subr.bf16.mxu0 0
  %67 = vmatpush1.bf16.msra.mxu0 %v49
  %68 = vmatprep.subr.bf16.mxu0 0
  %69 = vmatpush1.bf16.msra.mxu0 %v50
  %70 = vmatprep.subr.bf16.mxu0 0
  %71 = vmatpush1.bf16.msra.mxu0 %v51
  %72 = vmatprep.subr.bf16.mxu0 0
  %73 = vmatpush1.bf16.msra.mxu0 %v52
  %74 = vmatprep.subr.bf16.mxu0 0
  %75 = vmatpush1.bf16.msra.mxu0 %v64
  %76 = vmatprep.subr.bf16.mxu0 0
  %77 = vmatpush1.bf16.msra.mxu0 0
  %78 = vmatprep.subr.bf16.mxu0 0
  %79 = vmatpush1.bf16.msra.mxu0 0
  %80 = vmatprep.subr.bf16.mxu0 0
  %81 = vmatpush1.bf16.msra.mxu0 0
  %82 = vmatprep.subr.bf16.mxu0 0
  %83 = vmatpush1.bf16.msra.mxu0 0
  %84 = vmatprep.subr.bf16.mxu0 0
  %85 = vmatpush1.bf16.msra.mxu0 0
  %86 = vmatprep.subr.bf16.mxu0 0
  %87 = vmatpush1.bf16.msra.mxu0 0
  %88 = vmatprep.subr.bf16.mxu0 0
  %89 = vmatpush1.bf16.msra.mxu0 0
  %90 = vmatprep.subr.bf16.mxu0 0
  %91 = vmatpush1.bf16.msra.mxu0 0
  %92 = vmatprep.subr.bf16.mxu0 0
  %93 = vmatpush1.bf16.msra.mxu0 0
  %94 = vmatprep.subr.bf16.mxu0 0
  %95 = vmatpush1.bf16.msra.mxu0 0
  %96 = vmatprep.subr.bf16.mxu0 0
  %97 = vmatpush1.bf16.msra.mxu0 0
  %98 = vmatprep.mubr.bf16.mxu0 0
  %99 = vmatmul.mubr.bf16.gmra.mrb[0].mxu0 %v60
  %v100 = vpop.f32.mrb[0].mxu0
  %v101 = vadd.f32 0.0, %v100
  %v102 = vpop.f32.mrb[0].mxu0
  %v103 = vpop.f32.mrb[0].mxu0
  %v104 = vpop.f32.mrb[0].mxu0
  %105 = vdwg.mxu0
  %v106 = vld [vmem:[%s2] sm:$0xff]
  %108 = vset.pattern.permute.xlu0 0
  %109 = vperm.xlu0 %108, %v106
  %v110 = vpop.permute.xlu0 %109
  %v112 = vmul.f32 %v101, %v110
  %v113 = vld [vmem:[%s3] sm:$0xff]
  %115 = vset.pattern.permute.xlu0 0
  %116 = vperm.xlu0 %115, %v113
  %v117 = vpop.permute.xlu0 %116
  %v119 = vadd.f32 %v112, %v117
  %v120 = vmax.f32 %v119, 0.0
  %v121 = vld [vmem:[%s4] sm:$0xff]
  %v122 = vmul.f32 %v121, 2.0
  %v123 = vadd.f32 %v122, %v120
  %124 = vst [vmem:[%s5] sm:$0xff] %v123
  // Predicated region
  $region22: #{basic_block_forward.5} parent=0 // pred_check
    _
  $region23: #{basic_block_forward.5} parent=0 // pred_check_branch
    %126 = sbr.rel (0) target = $region25
  $region24: #{basic_block_forward.5} parent=0 // pred_region
    _
  $region25: #{basic_block_forward.5} parent=0 // pred_fallthru
    _
  // Predicated region
  $region26: #{basic_block_forward.5} parent=0 // pred_check
    _
  $region27: #{basic_block_forward.5} parent=0 // pred_check_branch
    %128 = sbr.rel (0) target = $region29
  $region28: #{basic_block_forward.5} parent=0 // pred_region
    _
  $region29: #{basic_block_forward.5} parent=0 // pred_fallthru
    _

</llo_original>
